<compile_context>
chip_gen: v7x
topology: tpu7x:2x2x1
jax: 0.10.0
libtpu: 0.0.40
codegen_flags: <defaults>
</compile_context>

<pallas_src>
import functools

import jax
import jax.numpy as jnp
from jax import lax
from jax.experimental import pallas as pl
from jax.experimental.pallas import tpu as pltpu

_LANE = 128


def _cdiv(a, b):
    return -(-a // b)


def _round_up(a, b):
    return _cdiv(a, b) * b


def _vmem_capacity_bytes():
    """Physical per-core VMEM; conservative 64 MiB fallback (v7x-sized)."""
    try:
        cap = int(getattr(pltpu.get_tpu_info(), "vmem_capacity_bytes", 0))
        if cap > 0:
            return cap
    except Exception:
        pass
    return 64 * 1024 * 1024


def _finite_mask(x):
    # Robust isfinite that lowers to 2 VPU ops for any float dtype:
    # |x| <= finfo(dtype).max  (False for +/-inf and NaN).
    return jnp.abs(x) <= jnp.asarray(jnp.finfo(x.dtype).max, x.dtype)


# ---------------------------------------------------------------------------
# Fused path (whole slab resident in VMEM): 2N HBM bytes total.
# ---------------------------------------------------------------------------
def _fused_kernel(x_ref, o_ref, *, nan_val, posinf_val, neginf_val):
    x = x_ref[...]
    dt = x.dtype
    fin = jnp.finfo(dt)
    need_max = posinf_val is None
    need_min = neginf_val is None
    if need_max or need_min:
        finite = _finite_mask(x)          # native dtype, no f32 promotion
    if need_max:
        posinf = jnp.max(jnp.where(finite, x, jnp.asarray(fin.min, dt)))
    else:
        posinf = jnp.asarray(posinf_val, dt)
    if need_min:
        neginf = jnp.min(jnp.where(finite, x, jnp.asarray(fin.max, dt)))
    else:
        neginf = jnp.asarray(neginf_val, dt)

    nan_c = jnp.asarray(nan_val, dt)
    isnan = x != x
    if need_max and need_min:
        # Clamping to the true finite max/min is a no-op on finite values.
        out = jnp.where(isnan, nan_c, jnp.clip(x, neginf, posinf))
    else:
        out = jnp.where(isnan, nan_c, x)
        out = jnp.where(x == jnp.asarray(jnp.inf, dt), posinf, out)
        out = jnp.where(x == jnp.asarray(-jnp.inf, dt), neginf, out)
    o_ref[...] = out


# ---------------------------------------------------------------------------
# Pass 1 (tiled path): global finite max / min.
#   * elementwise (VPU-only) fold in the NATIVE dtype into a resident
#     (sublane, cols) scratch accumulator
#   * ragged last row-block masked with a row iota
#   * final cross-lane reduce done in-kernel on the last step -> tiny
#     (P, 8, 128) f32 partial outputs (one per megacore slice)
# ---------------------------------------------------------------------------
def _finite_minmax_kernel(x_ref, pmax_ref, pmin_ref, acc_max, acc_min, *,
                          rows, tile_rows, n_inner, sub):
    i = pl.program_id(1)

    @pl.when(i == 0)
    def _init():
        acc_max[...] = jnp.full(acc_max.shape, jnp.finfo(acc_max.dtype).min,
                                acc_max.dtype)
        acc_min[...] = jnp.full(acc_min.shape, jnp.finfo(acc_min.dtype).max,
                                acc_min.dtype)

    x = x_ref[...]
    dt = x.dtype
    fin = jnp.finfo(dt)
    valid = _finite_mask(x)
    if rows % tile_rows != 0:
        # Ragged last block: rows past the real extent hold undefined data.
        blk = pl.program_id(0) * n_inner + i
        local = lax.broadcasted_iota(jnp.int32, x.shape, 0)
        valid = jnp.logical_and(valid, (blk * tile_rows + local) < rows)

    tr, cols = x.shape
    mmax = jnp.where(valid, x, jnp.asarray(fin.min, dt)).reshape(tr // sub, sub, cols)
    mmin = jnp.where(valid, x, jnp.asarray(fin.max, dt)).reshape(tr // sub, sub, cols)
    # Reduce over the leading (vreg-group) axis = elementwise VPU max/min; no
    # cross-lane/sublane XLU work per tile.
    acc_max[...] = jnp.maximum(acc_max[...], jnp.max(mmax, axis=0))
    acc_min[...] = jnp.minimum(acc_min[...], jnp.min(mmin, axis=0))

    @pl.when(i == n_inner - 1)
    def _finalize():
        smax = jnp.max(acc_max[...].astype(jnp.float32))
        smin = jnp.min(acc_min[...].astype(jnp.float32))
        pmax_ref[...] = jnp.full(pmax_ref.shape, smax, jnp.float32)
        pmin_ref[...] = jnp.full(pmin_ref.shape, smin, jnp.float32)


# ---------------------------------------------------------------------------
# Pass 2 (tiled path): elementwise nan / +inf / -inf replacement.
# Partials from pass 1 arrive as tiny resident (P, 8, 128) VMEM inputs, so no
# extra XLA dispatch happens between the two pallas_calls.
# ---------------------------------------------------------------------------
def _replace_dyn_kernel(pmax_ref, pmin_ref, x_ref, o_ref, *,
                        nan_val, posinf_val, neginf_val):
    x = x_ref[...]
    dt = x.dtype
    if posinf_val is None:
        posinf = jnp.max(pmax_ref[...].reshape(-1, _LANE)).astype(dt)
    else:
        posinf = jnp.asarray(posinf_val, dt)
    if neginf_val is None:
        neginf = jnp.min(pmin_ref[...].reshape(-1, _LANE)).astype(dt)
    else:
        neginf = jnp.asarray(neginf_val, dt)

    nan_c = jnp.asarray(nan_val, dt)
    isnan = x != x
    if posinf_val is None and neginf_val is None:
        out = jnp.where(isnan, nan_c, jnp.clip(x, neginf, posinf))
    else:
        out = jnp.where(isnan, nan_c, x)
        out = jnp.where(x == jnp.asarray(jnp.inf, dt), posinf, out)
        out = jnp.where(x == jnp.asarray(-jnp.inf, dt), neginf, out)
    o_ref[...] = out


def _replace_static_kernel(x_ref, o_ref, *, nan_val, posinf_val, neginf_val):
    x = x_ref[...]
    dt = x.dtype
    out = jnp.where(x != x, jnp.asarray(nan_val, dt), x)
    out = jnp.where(x == jnp.asarray(jnp.inf, dt), jnp.asarray(posinf_val, dt), out)
    out = jnp.where(x == jnp.asarray(-jnp.inf, dt), jnp.asarray(neginf_val, dt), out)
    o_ref[...] = out


# ---------------------------------------------------------------------------
# Wrapper (module-equivalent forward).
# ---------------------------------------------------------------------------
def _pick_cols(total, max_cols):
    """Largest multiple-of-128 lane width (prefers an exact divisor of total)."""
    if total <= max_cols:
        return _round_up(total, _LANE)
    for d in range(max_cols // _LANE, 0, -1):
        c = d * _LANE
        if total % c == 0:
            return c
    return max_cols  # no lane-dense divisor; rare pad fallback handles the rest


def nan_to_num_transform(x, nan=0.0, posinf=None, neginf=None, *,
                         fused_threshold_bytes=None,
                         max_cols=2048,
                         target_block_bytes=4 * 1024 * 1024):
    """Pallas TPU equivalent of NanToNumTransform.forward."""
    orig_shape = x.shape
    dtype = x.dtype
    if not jnp.issubdtype(dtype, jnp.floating):
        # TODO(synk): non-float inputs have no NaN/inf; nan_to_num is identity.
        return x
    total = x.size
    if total == 0:
        return x

    itemsize = jnp.dtype(dtype).itemsize
    sub = {4: 8, 2: 16, 1: 32}.get(itemsize, 8)
    need_reduce = (posinf is None) or (neginf is None)
    max_cols = max(_LANE, (max_cols // _LANE) * _LANE)

    vmem_cap = _vmem_capacity_bytes()
    if fused_threshold_bytes is None:
        # v7x-class (<=96 MiB VMEM, megacore): go tiled early; v5e/v6e: the
        # single-pass 2N-traffic fused path wins up to ~12 MiB.
        fused_threshold_bytes = (1 << 20) if vmem_cap <= 96 * 1024 * 1024 else (12 << 20)

    # Lane-dense slab; pad only when total is not a multiple of 128 (rare).
    cols = _pick_cols(total, max_cols)
    rows = _cdiv(total, cols)
    pad = rows * cols - total
    if pad:
        # TODO(synk): non-128-multiple totals still cost a pad+slice copy.
        x1 = jnp.concatenate([x.reshape(-1), jnp.full((pad,), jnp.nan, dtype)])
        x2 = x1.reshape(rows, cols)
    else:
        x2 = x.reshape(rows, cols)

    slab_bytes = rows * cols * itemsize
    fused_vmem_est = 5 * slab_bytes + (1 << 20)       # in + out + ~3 temps
    fused = (slab_bytes <= fused_threshold_bytes
             and fused_vmem_est <= (vmem_cap * 55) // 100)

    if fused:
        out2 = pl.pallas_call(
            functools.partial(_fused_kernel, nan_val=float(nan),
                              posinf_val=posinf, neginf_val=neginf),
            out_shape=jax.ShapeDtypeStruct((rows, cols), dtype),
            compiler_params=pltpu.CompilerParams(
                vmem_limit_bytes=min(int(vmem_cap * 0.85),
                                     8 * slab_bytes + (16 << 20))),
        )(x2)
    else:
        # --- tile selection (no "min 16 tiles" rule; ~target_block_bytes) ----
        tr_cap = max(sub, (target_block_bytes // (cols * itemsize)) // sub * sub)
        tile_rows = max(sub, min(tr_cap, _round_up(rows, sub)))
        n_tiles = _cdiv(rows, tile_rows)

        P = 1
        if need_reduce and n_tiles >= 4:
            if n_tiles % 2:
                # Shave the block so both megacore TCs (v7x) get whole tiles.
                tile_rows = max(sub, _round_up(_cdiv(rows, n_tiles + 1), sub))
                n_tiles = _cdiv(rows, tile_rows)
            if n_tiles % 2 == 0:
                P = 2
        n_inner = _cdiv(n_tiles, P)

        blk_bytes = tile_rows * cols * itemsize
        vmem_limit = min(int(vmem_cap * 0.85), 6 * blk_bytes + (16 << 20))

        if need_reduce:
            part_spec = pl.BlockSpec((None, 8, _LANE), lambda p, i: (p, 0, 0))
            pmax, pmin = pl.pallas_call(
                functools.partial(_finite_minmax_kernel, rows=rows,
                                  tile_rows=tile_rows, n_inner=n_inner, sub=sub),
                out_shape=(jax.ShapeDtypeStruct((P, 8, _LANE), jnp.float32),
                           jax.ShapeDtypeStruct((P, 8, _LANE), jnp.float32)),
                grid=(P, n_inner),
                in_specs=[pl.BlockSpec((tile_rows, cols),
                                       lambda p, i: (p * n_inner + i, 0))],
                out_specs=(part_spec, part_spec),
                scratch_shapes=[pltpu.VMEM((sub, cols), dtype),
                                pltpu.VMEM((sub, cols), dtype)],
                compiler_params=pltpu.CompilerParams(
                    dimension_semantics=("parallel", "arbitrary"),
                    vmem_limit_bytes=vmem_limit),
            )(x2)

        tile_spec = pl.BlockSpec((tile_rows, cols), lambda i: (i, 0))
        if need_reduce:
            small_spec = pl.BlockSpec((P, 8, _LANE), lambda i: (0, 0, 0))
            out2 = pl.pallas_call(
                functools.partial(_replace_dyn_kernel, nan_val=float(nan),
                                  posinf_val=posinf, neginf_val=neginf),
                out_shape=jax.ShapeDtypeStruct((rows, cols), dtype),
                grid=(n_tiles,),
                in_specs=[small_spec, small_spec, tile_spec],
                out_specs=tile_spec,
                compiler_params=pltpu.CompilerParams(
                    dimension_semantics=("parallel",),
                    vmem_limit_bytes=vmem_limit),
            )(pmax, pmin, x2)
        else:
            out2 = pl.pallas_call(
                functools.partial(_replace_static_kernel, nan_val=float(nan),
                                  posinf_val=float(posinf),
                                  neginf_val=float(neginf)),
                out_shape=jax.ShapeDtypeStruct((rows, cols), dtype),
                grid=(n_tiles,),
                in_specs=[tile_spec],
                out_specs=tile_spec,
                compiler_params=pltpu.CompilerParams(
                    dimension_semantics=("parallel",),
                    vmem_limit_bytes=vmem_limit),
            )(x2)

    if pad:
        return out2.reshape(-1)[:total].reshape(orig_shape)
    return out2.reshape(orig_shape)


# ---------------------------------------------------------------------------
# Reference (pure JAX) for verification.
# ---------------------------------------------------------------------------
def _reference(x, nan=0.0, posinf=None, neginf=None):
    finite = jnp.isfinite(x)
    if posinf is None:
        posinf = jnp.max(jnp.where(finite, x, jnp.finfo(x.dtype).min))
    if neginf is None:
        neginf = jnp.min(jnp.where(finite, x, jnp.finfo(x.dtype).max))
    out = jnp.where(jnp.isnan(x), jnp.asarray(nan, x.dtype), x)
    out = jnp.where(x == jnp.inf, jnp.asarray(posinf, x.dtype), out)
    out = jnp.where(x == -jnp.inf, jnp.asarray(neginf, x.dtype), out)
    return out


if __name__ == "__main__":
    k0, k1, k2, k3 = jax.random.split(jax.random.PRNGKey(0), 4)

    # Primary module-shaped input (batch=2, channels=4, 16x16 spatial).
    x = jax.random.normal(k0, (2, 4, 16, 16), dtype=jnp.float32)
    x = x.at[0, 0, 0, 0].set(jnp.nan)
    x = x.at[0, 1, 3, 5].set(jnp.inf)
    x = x.at[1, 2, 7, 9].set(-jnp.inf)
    x = x.at[1, 3, 15, 15].set(jnp.nan)
    ref = _reference(x)

    # 1) Default (fused single-pass) path.
    out_fused = jax.block_until_ready(nan_to_num_transform(x))
    assert out_fused.shape == x.shape and out_fused.dtype == x.dtype
    assert bool(jnp.all(jnp.isfinite(out_fused)))
    assert bool(jnp.all(out_fused == ref)), "fused path mismatch vs reference"

    # 2) Force the tiled two-pass path (small tiles, multi-tile accumulation).
    out_tiled = jax.block_until_ready(
        nan_to_num_transform(x, fused_threshold_bytes=0, max_cols=128,
                             target_block_bytes=4096))
    assert bool(jnp.all(out_tiled == ref)), "tiled path mismatch vs reference"

    # 3) Tiled path with a ragged last block and megacore partials (P=2).
    xb = jax.random.normal(k1, (2, 4, 88, 128), dtype=jnp.float32)
    xb = xb.at[0, 0, 0, 0].set(jnp.inf)
    xb = xb.at[1, 3, 87, 127].set(-jnp.inf)
    xb = xb.at[1, 1, 40, 64].set(jnp.nan)
    out_rag = jax.block_until_ready(
        nan_to_num_transform(xb, fused_threshold_bytes=0,
                             target_block_bytes=8 * 2048 * 4))
    assert bool(jnp.all(out_rag == _reference(xb))), "ragged tiled mismatch"

    # 4) Explicit posinf / neginf / nan values (fused, static constants).
    out_exp = jax.block_until_ready(
        nan_to_num_transform(x, nan=-1.0, posinf=5.0, neginf=-5.0))
    ref_exp = _reference(x, nan=-1.0, posinf=5.0, neginf=-5.0)
    assert bool(jnp.all(out_exp == ref_exp)), "explicit-value mismatch"

    # 5) bf16 input (native-dtype reduction, exact in bf16).
    xd = jax.random.normal(k2, (2, 4, 16, 16), dtype=jnp.bfloat16)
    xd = xd.at[0, 0, 0, 1].set(jnp.nan)
    xd = xd.at[1, 0, 2, 3].set(jnp.inf)
    xd = xd.at[0, 3, 8, 8].set(-jnp.inf)
    out_bf = jax.block_until_ready(nan_to_num_transform(xd))
    assert out_bf.dtype == jnp.bfloat16
    assert bool(jnp.all(out_bf == _reference(xd))), "bf16 fused mismatch"

    # 6) Non-128-multiple element count (rare pad+slice fallback path).
    xc = jax.random.normal(k3, (3, 5, 7), dtype=jnp.float32)
    xc = xc.at[0, 0, 0].set(jnp.nan)
    xc = xc.at[2, 4, 6].set(jnp.inf)
    out_c = jax.block_until_ready(nan_to_num_transform(xc))
    assert out_c.shape == xc.shape
    assert bool(jnp.all(out_c == _reference(xc))), "pad-fallback mismatch"

    print("KERNEL_OK")
</pallas_src>

<mosaic_0001>
module attributes {stable_mosaic.version = 11 : i64} {
  func.func @_fused_kernel(%arg0: memref<1x2048xf32, #tpu.memory_space<vmem>>, %arg1: memref<1x2048xf32, #tpu.memory_space<vmem>>) attributes {dimension_semantics = [], scalar_prefetch = 0 : i64, scratch_operands = 0 : i64, tpu.core_type = #tpu.core_type<tc>} {
    %c0 = arith.constant 0 : index
    %c0_0 = arith.constant 0 : index
    %0 = vector.load %arg0[%c0, %c0_0] : memref<1x2048xf32, #tpu.memory_space<vmem>>, vector<1x2048xf32>
    %1 = math.absf %0 : vector<1x2048xf32>
    %cst = arith.constant 3.40282347E+38 : f32
    %2 = vector.broadcast %cst : f32 to vector<1x2048xf32>
    %3 = arith.cmpf ole, %1, %2 : vector<1x2048xf32>
    %cst_1 = arith.constant -3.40282347E+38 : f32
    %4 = vector.broadcast %cst_1 : f32 to vector<1x2048xf32>
    %5 = arith.select %3, %0, %4 : vector<1x2048xi1>, vector<1x2048xf32>
    %6 = vector.shape_cast %5 : vector<1x2048xf32> to vector<1x1x2048xf32>
    %cst_2 = arith.constant dense<0xFF800000> : vector<1xf32>
    %7 = vector.multi_reduction <maximumf>, %6, %cst_2 [1, 2] : vector<1x1x2048xf32> to vector<1xf32>
    %8 = vector.shape_cast %7 : vector<1xf32> to vector<1x1x1xf32>
    %9 = vector.extract %8[0, 0, 0] : f32 from vector<1x1x1xf32>
    %cst_3 = arith.constant 3.40282347E+38 : f32
    %10 = vector.broadcast %cst_3 : f32 to vector<1x2048xf32>
    %11 = arith.select %3, %0, %10 : vector<1x2048xi1>, vector<1x2048xf32>
    %12 = vector.shape_cast %11 : vector<1x2048xf32> to vector<1x1x2048xf32>
    %cst_4 = arith.constant dense<0x7F800000> : vector<1xf32>
    %13 = vector.multi_reduction <minimumf>, %12, %cst_4 [1, 2] : vector<1x1x2048xf32> to vector<1xf32>
    %14 = vector.shape_cast %13 : vector<1xf32> to vector<1x1x1xf32>
    %15 = vector.extract %14[0, 0, 0] : f32 from vector<1x1x1xf32>
    %16 = arith.cmpf one, %0, %0 : vector<1x2048xf32>
    %17 = vector.broadcast %15 : f32 to vector<1x2048xf32>
    %18 = arith.maximumf %17, %0 : vector<1x2048xf32>
    %19 = vector.broadcast %9 : f32 to vector<1x2048xf32>
    %20 = arith.minimumf %19, %18 : vector<1x2048xf32>
    %cst_5 = arith.constant 0.000000e+00 : f32
    %21 = vector.broadcast %cst_5 : f32 to vector<1x2048xf32>
    %22 = arith.select %16, %21, %20 : vector<1x2048xi1>, vector<1x2048xf32>
    %c0_6 = arith.constant 0 : index
    %c0_7 = arith.constant 0 : index
    %23 = vector.load %arg1[%c0_6, %c0_7] : memref<1x2048xf32, #tpu.memory_space<vmem>>, vector<1x2048xf32>
    tpu.vector_store %arg1[%c0_6, %c0_7], %22 {strides = array<i32>} : memref<1x2048xf32, #tpu.memory_space<vmem>>, vector<1x2048xf32>,
    return
  }
}

</mosaic_0001>

<llo_original>
// kernel: tpu_custom_call.1
$region0: #{tpu_custom_call.1}
  #allocation0 [shape = 'u32[]', space=smem, size = 0x4, offset = 0x4, fixed_abs, tag = 'smem constant byte address 0x4 - core index']
  #allocation1 [shape = 'u32[144,128]{1,0:T(1,128)}', space=vmem, size = 0x12000, scoped, tag = 'internal scratch']
  %s0 = inlined_call_operand.hbm [shape: f32[1,2048], index: 0, kind: input, shape index: {}]
  %s1 = inlined_call_operand.hbm [shape: f32[1,2048], index: 1, kind: output, shape index: {}]
  %s2 = sld [smem:[#allocation0]]
  $region18: #{tpu_custom_call.1} parent=0
    _
  %s4 = ssub.s32 1, %s2
  %s5 = scalar_select 0, %s4, %s2
  $region1: #{tpu_custom_call.1} parent=0
    #allocation2 [shape = 'u8[8192]{0}', space=vmem, size = 0x2000, scoped, tag = 'input window, operand 0, single buffered']
    #allocation3 [shape = 's32[1]{0}', space=sflag, size = 0x4, scoped, tag = 'scoped memory for tpu_custom_call.1']
    #allocation4 [shape = 's32[1]{0}', space=sflag, size = 0x4, scoped, tag = 'scoped memory for tpu_custom_call.1']
    #allocation5 [shape = 'u8[8192]{0}', space=vmem, size = 0x2000, scoped, tag = 'output window, operand 0, single buffered']
    %6 = vsyncpa [#allocation3], 0
    %7 = vsyncpa [#allocation4], 0
    // Predicated region
    $region2: #{tpu_custom_call.1} parent=1 // pred_check
      _
    $region3: #{tpu_custom_call.1} parent=1 // pred_check_branch
      %9 = sbr.rel (0) target = $region5
    $region4: #{tpu_custom_call.1} parent=1 // pred_region
      %s11 = ssub.s32 256, 256
      %12 = vsyncadd [#allocation3], %s11
      %s14 = sshll.u32 [#allocation2], 4
      %s15 = int_to_ptr.vmem [resolvable:$true] %s14
      %17 = dma.hbm_to_vmem [thread:$0]  %s0, 256, %s15, [#allocation3]
    $region5: #{tpu_custom_call.1} parent=1 // pred_fallthru
      _
    // Predicated region
    $region6: #{tpu_custom_call.1} parent=1 // pred_check
      _
    $region7: #{tpu_custom_call.1} parent=1 // pred_check_branch
      %19 = sbr.rel (0) target = $region9
    $region8: #{tpu_custom_call.1} parent=1 // pred_region
      %20 = dma.done [#allocation3], 256
    $region9: #{tpu_custom_call.1} parent=1 // pred_fallthru
      _
    %v21 = vld [vmem:[#allocation2] sm:$0xff]
    %v22 = vld [vmem:[#allocation2 + $0x8] sm:$0xff]
    %v23 = vand.u32 2147483647, %v21
    %v24 = vand.u32 2147483647, %v22
    %vm25 = vcmp.le.f32.partialorder %v23, 3.4028235e+38
    %vm26 = vcmp.le.f32.partialorder %v24, 3.4028235e+38
    %v27 = vsel %vm25, %v21, -3.4028235e+38
    %v28 = vsel %vm26, %v22, -3.4028235e+38
    %v31 = vlaneseq
    %v32 = vshrl.u32 %v31, 7
    %v33 = vsub.s32 0, %v32
    %v34 = vrot.slane %v27, %v33
    %v35 = vlaneseq
    %v36 = vshrl.u32 %v35, 7
    %v37 = vsub.s32 1, %v36
    %v38 = vrot.slane %v27, %v37
    %v39 = vlaneseq
    %v40 = vshrl.u32 %v39, 7
    %v41 = vsub.s32 2, %v40
    %v42 = vrot.slane %v27, %v41
    %v43 = vlaneseq
    %v44 = vshrl.u32 %v43, 7
    %v45 = vsub.s32 3, %v44
    %v46 = vrot.slane %v27, %v45
    %v47 = vlaneseq
    %v48 = vshrl.u32 %v47, 7
    %v49 = vsub.s32 4, %v48
    %v50 = vrot.slane %v27, %v49
    %v51 = vlaneseq
    %v52 = vshrl.u32 %v51, 7
    %v53 = vsub.s32 5, %v52
    %v54 = vrot.slane %v27, %v53
    %v55 = vlaneseq
    %v56 = vshrl.u32 %v55, 7
    %v57 = vsub.s32 6, %v56
    %v58 = vrot.slane %v27, %v57
    %v59 = vlaneseq
    %v60 = vshrl.u32 %v59, 7
    %v61 = vsub.s32 7, %v60
    %v62 = vrot.slane %v27, %v61
    %v63 = vlaneseq
    %v64 = vshrl.u32 %v63, 7
    %v65 = vsub.s32 0, %v64
    %v66 = vrot.slane %v28, %v65
    %v67 = vlaneseq
    %v68 = vshrl.u32 %v67, 7
    %v69 = vsub.s32 1, %v68
    %v70 = vrot.slane %v28, %v69
    %v71 = vlaneseq
    %v72 = vshrl.u32 %v71, 7
    %v73 = vsub.s32 2, %v72
    %v74 = vrot.slane %v28, %v73
    %v75 = vlaneseq
    %v76 = vshrl.u32 %v75, 7
    %v77 = vsub.s32 3, %v76
    %v78 = vrot.slane %v28, %v77
    %v79 = vlaneseq
    %v80 = vshrl.u32 %v79, 7
    %v81 = vsub.s32 4, %v80
    %v82 = vrot.slane %v28, %v81
    %v83 = vlaneseq
    %v84 = vshrl.u32 %v83, 7
    %v85 = vsub.s32 5, %v84
    %v86 = vrot.slane %v28, %v85
    %v87 = vlaneseq
    %v88 = vshrl.u32 %v87, 7
    %v89 = vsub.s32 6, %v88
    %v90 = vrot.slane %v28, %v89
    %v91 = vlaneseq
    %v92 = vshrl.u32 %v91, 7
    %v93 = vsub.s32 7, %v92
    %v94 = vrot.slane %v28, %v93
    %vm111 = vcmask 1040384
    %v112 = vsel %vm111, %v34, -inf
    %v113 = vsel %vm111, %v38, -inf
    %v114 = vsel %vm111, %v42, -inf
    %v115 = vsel %vm111, %v46, -inf
    %v116 = vsel %vm111, %v50, -inf
    %v117 = vmax.f32 %v112, %v116
    %v118 = vsel %vm111, %v54, -inf
    %v119 = vmax.f32 %v113, %v118
    %v120 = vsel %vm111, %v58, -inf
    %v121 = vmax.f32 %v114, %v120
    %v122 = vsel %vm111, %v62, -inf
    %v123 = vmax.f32 %v115, %v122
    %v124 = vsel %vm111, %v66, -inf
    %v125 = vmax.f32 %v117, %v124
    %v126 = vsel %vm111, %v70, -inf
    %v127 = vmax.f32 %v119, %v126
    %v128 = vsel %vm111, %v74, -inf
    %v129 = vmax.f32 %v121, %v128
    %v130 = vsel %vm111, %v78, -inf
    %v131 = vmax.f32 %v123, %v130
    %v132 = vsel %vm111, %v82, -inf
    %v133 = vmax.f32 %v125, %v132
    %v134 = vsel %vm111, %v86, -inf
    %v135 = vmax.f32 %v127, %v134
    %v136 = vsel %vm111, %v90, -inf
    %v137 = vmax.f32 %v129, %v136
    %v138 = vsel %vm111, %v94, -inf
    %v139 = vmax.f32 %v131, %v138
    %v140 = vmax.f32 %v133, %v135
    %v141 = vmax.f32 %v137, %v139
    %v142 = vmax.f32 %v140, %v141
    %143 = vmax.xlane.f32.xlu0 %v142
    %v144 = vpop.xlane.xlu0 %143
    %v145 = vrot.slane %v144, 4
    %v146 = vmax.f32 %v144, %v145
    %v147 = vrot.slane %v146, 2
    %v148 = vmax.f32 %v146, %v147
    %v149 = vrot.slane %v148, 1
    %v150 = vmax.f32 %v148, %v149
    %s151 = vtos %v150
    %v152 = vsel %vm25, %v21, 3.4028235e+38
    %v153 = vsel %vm26, %v22, 3.4028235e+38
    %v156 = vlaneseq
    %v157 = vshrl.u32 %v156, 7
    %v158 = vsub.s32 0, %v157
    %v159 = vrot.slane %v152, %v158
    %v160 = vlaneseq
    %v161 = vshrl.u32 %v160, 7
    %v162 = vsub.s32 1, %v161
    %v163 = vrot.slane %v152, %v162
    %v164 = vlaneseq
    %v165 = vshrl.u32 %v164, 7
    %v166 = vsub.s32 2, %v165
    %v167 = vrot.slane %v152, %v166
    %v168 = vlaneseq
    %v169 = vshrl.u32 %v168, 7
    %v170 = vsub.s32 3, %v169
    %v171 = vrot.slane %v152, %v170
    %v172 = vlaneseq
    %v173 = vshrl.u32 %v172, 7
    %v174 = vsub.s32 4, %v173
    %v175 = vrot.slane %v152, %v174
    %v176 = vlaneseq
    %v177 = vshrl.u32 %v176, 7
    %v178 = vsub.s32 5, %v177
    %v179 = vrot.slane %v152, %v178
    %v180 = vlaneseq
    %v181 = vshrl.u32 %v180, 7
    %v182 = vsub.s32 6, %v181
    %v183 = vrot.slane %v152, %v182
    %v184 = vlaneseq
    %v185 = vshrl.u32 %v184, 7
    %v186 = vsub.s32 7, %v185
    %v187 = vrot.slane %v152, %v186
    %v188 = vlaneseq
    %v189 = vshrl.u32 %v188, 7
    %v190 = vsub.s32 0, %v189
    %v191 = vrot.slane %v153, %v190
    %v192 = vlaneseq
    %v193 = vshrl.u32 %v192, 7
    %v194 = vsub.s32 1, %v193
    %v195 = vrot.slane %v153, %v194
    %v196 = vlaneseq
    %v197 = vshrl.u32 %v196, 7
    %v198 = vsub.s32 2, %v197
    %v199 = vrot.slane %v153, %v198
    %v200 = vlaneseq
    %v201 = vshrl.u32 %v200, 7
    %v202 = vsub.s32 3, %v201
    %v203 = vrot.slane %v153, %v202
    %v204 = vlaneseq
    %v205 = vshrl.u32 %v204, 7
    %v206 = vsub.s32 4, %v205
    %v207 = vrot.slane %v153, %v206
    %v208 = vlaneseq
    %v209 = vshrl.u32 %v208, 7
    %v210 = vsub.s32 5, %v209
    %v211 = vrot.slane %v153, %v210
    %v212 = vlaneseq
    %v213 = vshrl.u32 %v212, 7
    %v214 = vsub.s32 6, %v213
    %v215 = vrot.slane %v153, %v214
    %v216 = vlaneseq
    %v217 = vshrl.u32 %v216, 7
    %v218 = vsub.s32 7, %v217
    %v219 = vrot.slane %v153, %v218
    %v236 = vsel %vm111, %v159, inf
    %v237 = vsel %vm111, %v163, inf
    %v238 = vsel %vm111, %v167, inf
    %v239 = vsel %vm111, %v171, inf
    %v240 = vsel %vm111, %v175, inf
    %v241 = vmin.f32 %v236, %v240
    %v242 = vsel %vm111, %v179, inf
    %v243 = vmin.f32 %v237, %v242
    %v244 = vsel %vm111, %v183, inf
    %v245 = vmin.f32 %v238, %v244
    %v246 = vsel %vm111, %v187, inf
    %v247 = vmin.f32 %v239, %v246
    %v248 = vsel %vm111, %v191, inf
    %v249 = vmin.f32 %v241, %v248
    %v250 = vsel %vm111, %v195, inf
    %v251 = vmin.f32 %v243, %v250
    %v252 = vsel %vm111, %v199, inf
    %v253 = vmin.f32 %v245, %v252
    %v254 = vsel %vm111, %v203, inf
    %v255 = vmin.f32 %v247, %v254
    %v256 = vsel %vm111, %v207, inf
    %v257 = vmin.f32 %v249, %v256
    %v258 = vsel %vm111, %v211, inf
    %v259 = vmin.f32 %v251, %v258
    %v260 = vsel %vm111, %v215, inf
    %v261 = vmin.f32 %v253, %v260
    %v262 = vsel %vm111, %v219, inf
    %v263 = vmin.f32 %v255, %v262
    %v264 = vmin.f32 %v257, %v259
    %v265 = vmin.f32 %v261, %v263
    %v266 = vmin.f32 %v264, %v265
    %267 = vmin.xlane.f32.xlu0 %v266
    %v268 = vpop.xlane.xlu0 %267
    %v269 = vrot.slane %v268, 4
    %v270 = vmin.f32 %v268, %v269
    %v271 = vrot.slane %v270, 2
    %v272 = vmin.f32 %v270, %v271
    %v273 = vrot.slane %v272, 1
    %v274 = vmin.f32 %v272, %v273
    %s275 = vtos %v274
    %vm276 = vcmp.ne.f32.partialorder %v21, %v21
    %vm277 = vcmp.ne.f32.partialorder %v22, %v22
    %v278 = vstv %s275
    %v279 = vmax.f32 %v278, %v21
    %v280 = vmax.f32 %v278, %v22
    %v281 = vstv %s151
    %v282 = vmin.f32 %v281, %v279
    %v283 = vmin.f32 %v281, %v280
    %v284 = vsel %vm276, 0.0, %v282
    %v285 = vsel %vm277, 0.0, %v283
    %286 = vst [vmem:[#allocation5] sm:$0xff] %v284
    %287 = vst [vmem:[#allocation5 + $0x8] sm:$0xff] %v285
    // Predicated region
    $region10: #{tpu_custom_call.1} parent=1 // pred_check
      _
    $region11: #{tpu_custom_call.1} parent=1 // pred_check_branch
      %289 = sbr.rel (0) target = $region13
    $region12: #{tpu_custom_call.1} parent=1 // pred_region
      %s291 = ssub.s32 256, 256
      %292 = vsyncadd [#allocation4], %s291
      %s294 = sshll.u32 [#allocation5], 4
      %s295 = int_to_ptr.vmem [resolvable:$true] %s294
      %297 = dma.vmem_to_hbm [thread:$0]  %s295, 256, %s1, [#allocation4]
    $region13: #{tpu_custom_call.1} parent=1 // pred_fallthru
      _
    // Predicated region
    $region14: #{tpu_custom_call.1} parent=1 // pred_check
      _
    $region15: #{tpu_custom_call.1} parent=1 // pred_check_branch
      %299 = sbr.rel (0) target = $region17
    $region16: #{tpu_custom_call.1} parent=1 // pred_region
      %300 = dma.done [#allocation4], 256
    $region17: #{tpu_custom_call.1} parent=1 // pred_fallthru
      _
    %301 = vsyncpa [#allocation3], 1
    %302 = vsyncpa [#allocation4], 1

</llo_original>
